<compile_context>
chip_gen: v7x
topology: tpu7x:2x2x1
jax: 0.10.0
libtpu: 0.0.40
codegen_flags: <defaults>
</compile_context>

<pallas_src>
import functools

import jax
import jax.numpy as jnp
from jax.experimental import pallas as pl
from jax.experimental.pallas import tpu as pltpu

NORM_EPS = 1e-12  # F.normalize default eps


def _metric_head_kernel(x_ref, w1_ref, b1_ref, w2_ref, b2_ref, out_ref):
    x = x_ref[...].astype(jnp.float32)

    # fc1: Linear(n_latent, n_hidden1) + ReLU
    h = jnp.dot(x, w1_ref[...], preferred_element_type=jnp.float32) + b1_ref[...]
    h = jnp.maximum(h, 0.0)

    # fc2: Linear(n_hidden1, n_hidden2)
    y = jnp.dot(h, w2_ref[...], preferred_element_type=jnp.float32) + b2_ref[...]

    # F.normalize(y, dim=1): y / max(||y||_2, eps)  ==  y * rsqrt(max(ss, eps^2))
    # (eps^2 = 1e-24 is a normal f32, so this is exactly equivalent in f32 and
    #  replaces sqrt + max + divide with a single EUP rsqrt + one VPU mul.)
    ss = jnp.sum(y * y, axis=1, keepdims=True)
    inv = jax.lax.rsqrt(jnp.maximum(ss, NORM_EPS * NORM_EPS))
    out_ref[...] = (y * inv).astype(out_ref.dtype)


def _round_up(v, m):
    return ((v + m - 1) // m) * m


def _vmem_bytes_estimate(tb, n_latent, n_hidden1, n_hidden2):
    """Rough VMEM footprint (bytes) for one pipelined grid step (f32)."""
    f32 = 4
    weights = (n_latent * n_hidden1 + n_hidden1 + n_hidden1 * n_hidden2 + n_hidden2) * f32
    weights *= 2                                           # default double-buffering
    io = 2 * (tb * n_latent + tb * n_hidden2) * f32        # x / out, double-buffered
    inter = (tb * n_hidden1 + tb * n_hidden2) * f32        # h, y intermediates
    return weights + io + inter


def _choose_batch_tile(B, tile_b, n_latent, n_hidden1, n_hidden2):
    """Pick a batch tile: multiple of 8, >=2 grid steps when possible, VMEM-safe."""
    vmem_budget = 40 * 1024 * 1024  # conservative: fits v7x's 64 MiB physical VMEM

    tb = min(tile_b, _round_up(B, 8))
    tb = max(8, _round_up(tb, 8))

    # v7x has 2 TensorCores: make sure the "parallel" batch axis has >= 2 steps
    # whenever the batch permits, otherwise one core sits idle.
    if pl.cdiv(B, tb) < 2 and B > 8:
        tb = max(8, _round_up(pl.cdiv(B, 2), 8))

    # Shrink until the pipelined working set fits the VMEM budget.
    while tb > 8 and _vmem_bytes_estimate(tb, n_latent, n_hidden1, n_hidden2) > vmem_budget:
        tb = max(8, _round_up(tb // 2, 8))

    return tb


@functools.partial(jax.jit, static_argnames=("tile_b",))
def metric_head_forward(x, params, *, tile_b=512):
    """x: (B, n_latent) float32. Returns L2-normalized (B, n_hidden2) float32."""
    B, n_latent = x.shape
    n_hidden1 = params["w1"].shape[1]
    n_hidden2 = params["w2"].shape[1]

    tb = _choose_batch_tile(B, tile_b, n_latent, n_hidden1, n_hidden2)
    grid = (pl.cdiv(B, tb),)  # last block may be padded; padded rows never read back

    # Requirement-derived VMEM limit with headroom; capped at 48 MiB so it
    # stays well under v7x's 64 MiB physical VMEM (v5e/v6e have 128 MiB).
    est = _vmem_bytes_estimate(tb, n_latent, n_hidden1, n_hidden2)
    vmem_limit = min(max(int(est * 1.5) + (4 << 20), 32 << 20), 48 << 20)

    out = pl.pallas_call(
        _metric_head_kernel,
        out_shape=jax.ShapeDtypeStruct((B, n_hidden2), jnp.float32),
        grid=grid,
        in_specs=[
            pl.BlockSpec((tb, n_latent), lambda i: (i, 0)),          # x tile (pipelined)
            pl.BlockSpec((n_latent, n_hidden1), lambda i: (0, 0)),   # W1 (resident)
            pl.BlockSpec((1, n_hidden1), lambda i: (0, 0)),          # b1 (resident)
            pl.BlockSpec((n_hidden1, n_hidden2), lambda i: (0, 0)),  # W2 (resident)
            pl.BlockSpec((1, n_hidden2), lambda i: (0, 0)),          # b2 (resident)
        ],
        out_specs=pl.BlockSpec((tb, n_hidden2), lambda i: (i, 0)),
        compiler_params=pltpu.CompilerParams(
            dimension_semantics=("parallel",),   # shard batch tiles across TCs (v7x)
            vmem_limit_bytes=vmem_limit,
        ),
    )(x, params["w1"], params["b1"], params["w2"], params["b2"])
    return out


def init_params(key, n_latent, n_hidden1, n_hidden2):
    """Deterministic synthetic parameters (PyTorch Linear default init shapes)."""
    ks = jax.random.split(key, 4)

    def u(k, shape, fan_in):
        bound = 1.0 / jnp.sqrt(fan_in)
        return jax.random.uniform(k, shape, jnp.float32, -bound, bound)

    return {
        # fc1: Linear(n_latent, n_hidden1)
        "w1": u(ks[0], (n_latent, n_hidden1), n_latent),
        "b1": u(ks[1], (1, n_hidden1), n_latent),
        # fc2: Linear(n_hidden1, n_hidden2)
        "w2": u(ks[2], (n_hidden1, n_hidden2), n_hidden1),
        "b2": u(ks[3], (1, n_hidden2), n_hidden1),
    }


def reference_forward(x, params):
    """Pure-JAX reference mirroring the PyTorch forward."""
    h = jnp.maximum(x @ params["w1"] + params["b1"], 0.0)
    y = h @ params["w2"] + params["b2"]
    norm = jnp.sqrt(jnp.sum(y * y, axis=1, keepdims=True))
    return y / jnp.maximum(norm, NORM_EPS)


if __name__ == "__main__":
    B, n_latent, n_hidden1, n_hidden2 = 16, 32, 64, 32

    key = jax.random.PRNGKey(0)
    k_x, k_p = jax.random.split(key)
    x = jax.random.normal(k_x, (B, n_latent), jnp.float32)
    params = init_params(k_p, n_latent, n_hidden1, n_hidden2)

    # Auto tile selection: B=16 -> tb=8, grid=(2,) so both v7x cores get work.
    out = metric_head_forward(x, params)
    jax.block_until_ready(out)

    out_ref = reference_forward(x, params)
    assert out.shape == (B, n_hidden2)
    assert jnp.allclose(out, out_ref, atol=1e-5, rtol=1e-5)
    # rows should be unit-norm
    assert jnp.allclose(jnp.linalg.norm(out, axis=1), 1.0, atol=1e-5)

    print("KERNEL_OK")
</pallas_src>

<mosaic_0001>
module attributes {stable_mosaic.version = 11 : i64} {
  func.func @_metric_head_kernel(%arg0: i32, %arg1: memref<8x32xf32, #tpu.memory_space<vmem>>, %arg2: memref<32x64xf32, #tpu.memory_space<vmem>>, %arg3: memref<1x64xf32, #tpu.memory_space<vmem>>, %arg4: memref<64x32xf32, #tpu.memory_space<vmem>>, %arg5: memref<1x32xf32, #tpu.memory_space<vmem>>, %arg6: memref<8x32xf32, #tpu.memory_space<vmem>>) attributes {dimension_semantics = [#tpu.dimension_semantics<parallel>], iteration_bounds = array<i64: 2>, scalar_prefetch = 0 : i64, scratch_operands = 0 : i64, tpu.core_type = #tpu.core_type<tc>, window_params = [{transform_indices = @transform_0, window_bounds = array<i64: 8, 32>}, {pipeline_mode = #tpu.pipeline_mode<synchronous>, transform_indices = @transform_1, window_bounds = array<i64: 32, 64>}, {pipeline_mode = #tpu.pipeline_mode<synchronous>, transform_indices = @transform_2, window_bounds = array<i64: 1, 64>}, {pipeline_mode = #tpu.pipeline_mode<synchronous>, transform_indices = @transform_3, window_bounds = array<i64: 64, 32>}, {pipeline_mode = #tpu.pipeline_mode<synchronous>, transform_indices = @transform_4, window_bounds = array<i64: 1, 32>}, {transform_indices = @transform_5, window_bounds = array<i64: 8, 32>}]} {
    %c0 = arith.constant 0 : index
    %c0_0 = arith.constant 0 : index
    %0 = vector.load %arg1[%c0, %c0_0] : memref<8x32xf32, #tpu.memory_space<vmem>>, vector<8x32xf32>
    %c0_1 = arith.constant 0 : index
    %c0_2 = arith.constant 0 : index
    %1 = vector.load %arg2[%c0_1, %c0_2] : memref<32x64xf32, #tpu.memory_space<vmem>>, vector<32x64xf32>
    %cst = arith.constant dense<0.000000e+00> : vector<8x64xf32>
    %2 = tpu.matmul %0, %1, %cst {dimension_numbers = #tpu.dot_dimension_numbers<[1], [0], [0], [1], [0, 0, 1, 1], [], []>} : vector<8x32xf32>, vector<32x64xf32>, vector<8x64xf32> -> vector<8x64xf32>
    %c0_3 = arith.constant 0 : index
    %c0_4 = arith.constant 0 : index
    %3 = vector.load %arg3[%c0_3, %c0_4] : memref<1x64xf32, #tpu.memory_space<vmem>>, vector<1x64xf32>
    %4 = vector.broadcast %3 : vector<1x64xf32> to vector<8x64xf32>
    %5 = arith.addf %2, %4 : vector<8x64xf32>
    %cst_5 = arith.constant 0.000000e+00 : f32
    %6 = vector.broadcast %cst_5 : f32 to vector<8x64xf32>
    %7 = arith.maximumf %5, %6 : vector<8x64xf32>
    %c0_6 = arith.constant 0 : index
    %c0_7 = arith.constant 0 : index
    %8 = vector.load %arg4[%c0_6, %c0_7] : memref<64x32xf32, #tpu.memory_space<vmem>>, vector<64x32xf32>
    %cst_8 = arith.constant dense<0.000000e+00> : vector<8x32xf32>
    %9 = tpu.matmul %7, %8, %cst_8 {dimension_numbers = #tpu.dot_dimension_numbers<[1], [0], [0], [1], [0, 0, 1, 1], [], []>} : vector<8x64xf32>, vector<64x32xf32>, vector<8x32xf32> -> vector<8x32xf32>
    %c0_9 = arith.constant 0 : index
    %c0_10 = arith.constant 0 : index
    %10 = vector.load %arg5[%c0_9, %c0_10] : memref<1x32xf32, #tpu.memory_space<vmem>>, vector<1x32xf32>
    %11 = vector.broadcast %10 : vector<1x32xf32> to vector<8x32xf32>
    %12 = arith.addf %9, %11 : vector<8x32xf32>
    %13 = arith.mulf %12, %12 : vector<8x32xf32>
    %cst_11 = arith.constant dense<0.000000e+00> : vector<8xf32>
    %14 = vector.multi_reduction <add>, %13, %cst_11 [1] : vector<8x32xf32> to vector<8xf32>
    %15 = vector.shape_cast %14 : vector<8xf32> to vector<8x1xf32>
    %cst_12 = arith.constant 1.000000e-24 : f32
    %16 = vector.broadcast %cst_12 : f32 to vector<8x1xf32>
    %17 = arith.maximumf %15, %16 : vector<8x1xf32>
    %18 = math.rsqrt %17 : vector<8x1xf32>
    %19 = vector.broadcast %18 : vector<8x1xf32> to vector<8x32xf32>
    %20 = arith.mulf %12, %19 : vector<8x32xf32>
    %c0_13 = arith.constant 0 : index
    %c0_14 = arith.constant 0 : index
    %21 = vector.load %arg6[%c0_13, %c0_14] : memref<8x32xf32, #tpu.memory_space<vmem>>, vector<8x32xf32>
    tpu.vector_store %arg6[%c0_13, %c0_14], %20 {strides = array<i32>} : memref<8x32xf32, #tpu.memory_space<vmem>>, vector<8x32xf32>,
    return
  }
  func.func @transform_0(%arg0: i32) -> (i32, i32) {
    %c0_i32 = arith.constant 0 : i32
    %c0_i32_0 = arith.constant 0 : i32
    return %arg0, %c0_i32 : i32, i32
  }
  func.func @transform_1(%arg0: i32) -> (i32, i32) {
    %c0_i32 = arith.constant 0 : i32
    %c0_i32_0 = arith.constant 0 : i32
    %c0_i32_1 = arith.constant 0 : i32
    return %c0_i32, %c0_i32_0 : i32, i32
  }
  func.func @transform_2(%arg0: i32) -> (i32, i32) {
    %c0_i32 = arith.constant 0 : i32
    %c0_i32_0 = arith.constant 0 : i32
    %c0_i32_1 = arith.constant 0 : i32
    return %c0_i32, %c0_i32_0 : i32, i32
  }
  func.func @transform_3(%arg0: i32) -> (i32, i32) {
    %c0_i32 = arith.constant 0 : i32
    %c0_i32_0 = arith.constant 0 : i32
    %c0_i32_1 = arith.constant 0 : i32
    return %c0_i32, %c0_i32_0 : i32, i32
  }
  func.func @transform_4(%arg0: i32) -> (i32, i32) {
    %c0_i32 = arith.constant 0 : i32
    %c0_i32_0 = arith.constant 0 : i32
    %c0_i32_1 = arith.constant 0 : i32
    return %c0_i32, %c0_i32_0 : i32, i32
  }
  func.func @transform_5(%arg0: i32) -> (i32, i32) {
    %c0_i32 = arith.constant 0 : i32
    %c0_i32_0 = arith.constant 0 : i32
    return %arg0, %c0_i32 : i32, i32
  }
}

</mosaic_0001>

<llo_original>
// kernel: metric_head_forward.1
$region0: #{metric_head_forward.1}
  #allocation0 [shape = 'u32[]', space=smem, size = 0x4, offset = 0x4, fixed_abs, tag = 'smem constant byte address 0x4 - core index']
  #allocation1 [shape = 'u32[144,128]{1,0:T(1,128)}', space=vmem, size = 0x12000, scoped, tag = 'internal scratch']
  %s0 = inlined_call_operand.vmem [shape: f32[16,32], index: 0, kind: input, shape index: {}]
  %s1 = inlined_call_operand.vmem [shape: f32[32,64], index: 1, kind: input, shape index: {}]
  %s2 = inlined_call_operand.vmem [shape: f32[1,64], index: 2, kind: input, shape index: {}]
  %s3 = inlined_call_operand.vmem [shape: f32[64,32], index: 3, kind: input, shape index: {}]
  %s4 = inlined_call_operand.vmem [shape: f32[1,32], index: 4, kind: input, shape index: {}]
  %s5 = inlined_call_operand.hbm [shape: f32[16,32], index: 5, kind: output, shape index: {}]
  %s6 = sld [smem:[#allocation0]]
  $region53: #{metric_head_forward.1} parent=0
    _
  %s8 = ssub.s32 1, %s6
  %s9 = scalar_select 0, %s8, %s6
  $region1: #{metric_head_forward.1} parent=0
    #allocation2 [shape = 'u8[8192]{0}', space=vmem, size = 0x2000, scoped, tag = 'output window, operand 0']
    #allocation3 [shape = 's32[2]{0}', space=sflag, size = 0x8, scoped, tag = 'scoped memory for metric_head_forward.1']
    %10 = vsyncpa [#allocation3], 0
    %s11 = scalar_lea.sflag [#allocation3], 1
    %12 = vsyncpa %s11, 0
    loop: start=0, step=1, limit=4
    $region2: #{metric_head_forward.1} parent=1 // loop_pre_header
      _
    $region3: #{metric_head_forward.1} parent=1 // loop_header
      %s14 = sphi 0, %s18
      %p15 = scmp.ge.s32.totalorder %s14, 4
      %s24 = sphi 0, %s26
      %s27 = sphi 0, %s24
      %s28 = sphi 0, %s27
      %s44 = sphi 0, %s28
      %s48 = sphi 0, %s48
      %s50 = sphi 0, %s48
      %s51 = sphi 0, %s50
      %s65 = sphi 0, %s51
      %s69 = sphi 0, %s69
      %s71 = sphi 0, %s69
      %s72 = sphi 0, %s71
      %s86 = sphi 0, %s72
      %s90 = sphi 0, %s90
      %s92 = sphi 0, %s90
      %s93 = sphi 0, %s92
      %s107 = sphi 0, %s93
      %s111 = sphi 0, %s111
      %s113 = sphi 0, %s111
      %s114 = sphi 0, %s113
      %s128 = sphi 0, %s114
      %s134 = sphi 0, %s136
      %s137 = sphi 0, %s134
      %s138 = sphi 0, %s137
      %s154 = sphi 0, %s138
    $region4: #{metric_head_forward.1} parent=1 // loop_header_branch
      %17 = sbr.rel (%p15) target = $region8
    $region5: #{metric_head_forward.1} parent=1 // loop_body
      %s19 = ssub.s32 %s14, 1
      %s20 = ssub.s32 %s14, 2
      %s21 = sadd.s32 %s14, 1
      %s22 = ssub.s32 %s14, %s21
      %p23 = scmp.eq.s32.totalorder %s22, 0
      %s25 = sadd.s32 %s24, 1
      %s26 = scalar_select %p23, %s24, %s25
      %p29 = pneg %p23
      %p30 = scmp.eq.s32.totalorder %s14, 1
      %p31 = por %p29, %p30
      %p32 = scmp.ne.s32.totalorder %s24, %s27
      %p33 = scmp.eq.s32.totalorder %s14, 0
      %p34 = por %p32, %p33
      %p35 = scmp.ne.s32.totalorder %s24, %s27
      %p36 = scmp.eq.s32.totalorder %s19, 1
      %p37 = por %p35, %p36
      %p38 = scmp.ne.s32.totalorder %s27, %s28
      %p39 = scmp.eq.s32.totalorder %s19, 0
      %p40 = por %p38, %p39
      %p41 = scmp.ne.s32.totalorder %s27, %s28
      %p42 = scmp.eq.s32.totalorder %s20, 1
      %p43 = por %p41, %p42
      %p45 = scmp.ne.s32.totalorder %s28, %s44
      %p46 = scmp.eq.s32.totalorder %s20, 0
      %p47 = por %p45, %p46
      %s49 = sadd.s32 %s48, 1
      %p52 = scmp.eq.s32.totalorder %s14, 1
      %p53 = scmp.ne.s32.totalorder %s48, %s50
      %p54 = scmp.eq.s32.totalorder %s14, 0
      %p55 = por %p53, %p54
      %p56 = scmp.ne.s32.totalorder %s48, %s50
      %p57 = scmp.eq.s32.totalorder %s19, 1
      %p58 = por %p56, %p57
      %p59 = scmp.ne.s32.totalorder %s50, %s51
      %p60 = scmp.eq.s32.totalorder %s19, 0
      %p61 = por %p59, %p60
      %p62 = scmp.ne.s32.totalorder %s50, %s51
      %p63 = scmp.eq.s32.totalorder %s20, 1
      %p64 = por %p62, %p63
      %p66 = scmp.ne.s32.totalorder %s51, %s65
      %p67 = scmp.eq.s32.totalorder %s20, 0
      %p68 = por %p66, %p67
      %s70 = sadd.s32 %s69, 1
      %p73 = scmp.eq.s32.totalorder %s14, 1
      %p74 = scmp.ne.s32.totalorder %s69, %s71
      %p75 = scmp.eq.s32.totalorder %s14, 0
      %p76 = por %p74, %p75
      %p77 = scmp.ne.s32.totalorder %s69, %s71
      %p78 = scmp.eq.s32.totalorder %s19, 1
      %p79 = por %p77, %p78
      %p80 = scmp.ne.s32.totalorder %s71, %s72
      %p81 = scmp.eq.s32.totalorder %s19, 0
      %p82 = por %p80, %p81
      %p83 = scmp.ne.s32.totalorder %s71, %s72
      %p84 = scmp.eq.s32.totalorder %s20, 1
      %p85 = por %p83, %p84
      %p87 = scmp.ne.s32.totalorder %s72, %s86
      %p88 = scmp.eq.s32.totalorder %s20, 0
      %p89 = por %p87, %p88
      %s91 = sadd.s32 %s90, 1
      %p94 = scmp.eq.s32.totalorder %s14, 1
      %p95 = scmp.ne.s32.totalorder %s90, %s92
      %p96 = scmp.eq.s32.totalorder %s14, 0
      %p97 = por %p95, %p96
      %p98 = scmp.ne.s32.totalorder %s90, %s92
      %p99 = scmp.eq.s32.totalorder %s19, 1
      %p100 = por %p98, %p99
      %p101 = scmp.ne.s32.totalorder %s92, %s93
      %p102 = scmp.eq.s32.totalorder %s19, 0
      %p103 = por %p101, %p102
      %p104 = scmp.ne.s32.totalorder %s92, %s93
      %p105 = scmp.eq.s32.totalorder %s20, 1
      %p106 = por %p104, %p105
      %p108 = scmp.ne.s32.totalorder %s93, %s107
      %p109 = scmp.eq.s32.totalorder %s20, 0
      %p110 = por %p108, %p109
      %s112 = sadd.s32 %s111, 1
      %p115 = scmp.eq.s32.totalorder %s14, 1
      %p116 = scmp.ne.s32.totalorder %s111, %s113
      %p117 = scmp.eq.s32.totalorder %s14, 0
      %p118 = por %p116, %p117
      %p119 = scmp.ne.s32.totalorder %s111, %s113
      %p120 = scmp.eq.s32.totalorder %s19, 1
      %p121 = por %p119, %p120
      %p122 = scmp.ne.s32.totalorder %s113, %s114
      %p123 = scmp.eq.s32.totalorder %s19, 0
      %p124 = por %p122, %p123
      %p125 = scmp.ne.s32.totalorder %s113, %s114
      %p126 = scmp.eq.s32.totalorder %s20, 1
      %p127 = por %p125, %p126
      %p129 = scmp.ne.s32.totalorder %s114, %s128
      %p130 = scmp.eq.s32.totalorder %s20, 0
      %p131 = por %p129, %p130
      %s132 = ssub.s32 %s14, %s21
      %p133 = scmp.eq.s32.totalorder %s132, 0
      %s135 = sadd.s32 %s134, 1
      %s136 = scalar_select %p133, %s134, %s135
      %p139 = pneg %p133
      %p140 = scmp.eq.s32.totalorder %s14, 1
      %p141 = por %p139, %p140
      %p142 = scmp.ne.s32.totalorder %s134, %s137
      %p143 = scmp.eq.s32.totalorder %s14, 0
      %p144 = por %p142, %p143
      %p145 = scmp.ne.s32.totalorder %s134, %s137
      %p146 = scmp.eq.s32.totalorder %s19, 1
      %p147 = por %p145, %p146
      %p148 = scmp.ne.s32.totalorder %s137, %s138
      %p149 = scmp.eq.s32.totalorder %s19, 0
      %p150 = por %p148, %p149
      %p151 = scmp.ne.s32.totalorder %s137, %s138
      %p152 = scmp.eq.s32.totalorder %s20, 1
      %p153 = por %p151, %p152
      %p155 = scmp.ne.s32.totalorder %s138, %s154
      %p156 = scmp.eq.s32.totalorder %s20, 0
      %p157 = por %p155, %p156
      %p158 = scmp.le.s32.totalorder 1, %s14
      %p159 = scmp.lt.s32.totalorder %s14, 3
      %p160 = pnand %p158, %p159
      %p161 = pneg %p160
      // Predicated region
      $region9: #{metric_head_forward.1} parent=5 // pred_check
        _
      $region10: #{metric_head_forward.1} parent=5 // pred_check_branch
        %163 = sbr.rel (%p160) target = $region12
      $region11: #{metric_head_forward.1} parent=5 // pred_region
        %s164 = ssub.s32 %s14, 1
        // Predicated region
        $region13: #{metric_head_forward.1} parent=11 // pred_check
          %p165 = pneg %p61
        $region14: #{metric_head_forward.1} parent=11 // pred_check_branch
          %167 = sbr.rel (%p165) target = $region16
        $region15: #{metric_head_forward.1} parent=11 // pred_region
          _
        $region16: #{metric_head_forward.1} parent=11 // pred_fallthru
          _
        // Predicated region
        $region17: #{metric_head_forward.1} parent=11 // pred_check
          %p168 = pneg %p82
        $region18: #{metric_head_forward.1} parent=11 // pred_check_branch
          %170 = sbr.rel (%p168) target = $region20
        $region19: #{metric_head_forward.1} parent=11 // pred_region
          _
        $region20: #{metric_head_forward.1} parent=11 // pred_fallthru
          _
        // Predicated region
        $region21: #{metric_head_forward.1} parent=11 // pred_check
          %p171 = pneg %p103
        $region22: #{metric_head_forward.1} parent=11 // pred_check_branch
          %173 = sbr.rel (%p171) target = $region24
        $region23: #{metric_head_forward.1} parent=11 // pred_region
          _
        $region24: #{metric_head_forward.1} parent=11 // pred_fallthru
          _
        // Predicated region
        $region25: #{metric_head_forward.1} parent=11 // pred_check
          %p174 = pneg %p124
        $region26: #{metric_head_forward.1} parent=11 // pred_check_branch
          %176 = sbr.rel (%p174) target = $region28
        $region27: #{metric_head_forward.1} parent=11 // pred_region
          _
        $region28: #{metric_head_forward.1} parent=11 // pred_fallthru
          _
      $region12: #{metric_head_forward.1} parent=5 // pred_fallthru
        _
      %p177 = scmp.lt.s32.totalorder %s14, 2
      // Predicated region
      $region29: #{metric_head_forward.1} parent=5 // pred_check
        %p178 = pneg %p177
      $region30: #{metric_head_forward.1} parent=5 // pred_check_branch
        %180 = sbr.rel (%p178) target = $region32
      $region31: #{metric_head_forward.1} parent=5 // pred_region
        // Predicated region
        $region33: #{metric_head_forward.1} parent=31 // pred_check
          %p181 = pneg %p34
        $region34: #{metric_head_forward.1} parent=31 // pred_check_branch
          %183 = sbr.rel (%p181) target = $region36
        $region35: #{metric_head_forward.1} parent=31 // pred_region
          %p184 = scmp.lt.s32.totalorder %s14, 1
          %s185 = scalar_select %p184, %s14, 1
          %s186 = smul.addr %s185, 8
          %s187 = scalar_lea.vmem %s0, %s186
        $region36: #{metric_head_forward.1} parent=31 // pred_fallthru
          _
      $region32: #{metric_head_forward.1} parent=5 // pred_fallthru
        _
      %p188 = scmp.le.s32.totalorder 1, %s14
      %p189 = scmp.lt.s32.totalorder %s14, 3
      %p190 = pnand %p188, %p189
      %p191 = pneg %p190
      // Predicated region
      $region37: #{metric_head_forward.1} parent=5 // pred_check
        _
      $region38: #{metric_head_forward.1} parent=5 // pred_check_branch
        %193 = sbr.rel (%p190) target = $region40
      $region39: #{metric_head_forward.1} parent=5 // pred_region
        %s194 = ssub.s32 %s14, 1
        %p195 = scmp.lt.s32.totalorder %s19, 1
        %s196 = scalar_select %p195, %s19, 1
        %s197 = smul.addr %s196, 8
        %s198 = scalar_lea.vmem %s0, %s197
        %p199 = pneg %p40
        %p200 = pneg %p37
        %p201 = pneg %p61
        %p202 = pneg %p58
        %p203 = pneg %p82
        %p204 = pneg %p79
        %p205 = pneg %p103
        %p206 = pneg %p100
        %p207 = pneg %p124
        %p208 = pneg %p121
        %p209 = pneg %p150
        %p210 = pneg %p147
        %s211 = sand.u32 %s137, 1
        %s212 = scalar_lea.sflag [#allocation3], %s211
        %s213 = sand.u32 %s137, 1
        %s214 = smul.addr %s213, 8
        %s215 = scalar_lea.vmem [#allocation2], %s214
        %p216 = scmp.lt.s32.totalorder %s19, 1
        %s217 = scalar_select %p216, %s19, 1
        %s218 = smul.addr %s217, 8
        %s219 = scalar_lea.vmem %s0, %s218
        %v220 = vld [vmem:[%s219] sm:$0xff]
        %v221 = vld [vmem:[%s1] sm:$0xff]
        %v222 = vld [vmem:[%s1 + $0x8] sm:$0xff]
        %v223 = vld [vmem:[%s1 + $0x10] sm:$0xff]
        %v224 = vld [vmem:[%s1 + $0x18] sm:$0xff]
        %v225 = vld [vmem:[%s2] sm:$0x1]
        %v227 = vlaneseq
        %v228 = vshrl.u32 %v227, 7
        %v229 = vsub.s32 0, %v228
        %v230 = vrot.slane %v225, %v229
        %vm232 = vcmask 261120
        %v234 = vsel %vm232, %v220, 0
        %236 = vmatprep.subr.mxu0 0.0
        %237 = vmatpush1.msra.mxu0 %v221
        %238 = vmatprep.subr.mxu0 0.0
        %239 = vmatpush1.msra.mxu0 %v222
        %240 = vmatprep.subr.mxu0 0.0
        %241 = vmatpush1.msra.mxu0 %v223
        %242 = vmatprep.subr.mxu0 0.0
        %243 = vmatpush1.msra.mxu0 %v224
        %244 = vmatprep.subr.mxu0 0.0
        %245 = vmatpush1.msra.mxu0 0.0
        %246 = vmatprep.subr.mxu0 0.0
        %247 = vmatpush1.msra.mxu0 0.0
        %248 = vmatprep.subr.mxu0 0.0
        %249 = vmatpush1.msra.mxu0 0.0
        %250 = vmatprep.subr.mxu0 0.0
        %251 = vmatpush1.msra.mxu0 0.0
        %252 = vmatprep.subr.mxu0 0.0
        %253 = vmatpush1.msra.mxu0 0.0
        %254 = vmatprep.subr.mxu0 0.0
        %255 = vmatpush1.msra.mxu0 0.0
        %256 = vmatprep.subr.mxu0 0.0
        %257 = vmatpush1.msra.mxu0 0.0
        %258 = vmatprep.subr.mxu0 0.0
        %259 = vmatpush1.msra.mxu0 0.0
        %260 = vmatprep.subr.mxu0 0.0
        %261 = vmatpush1.msra.mxu0 0.0
        %262 = vmatprep.subr.mxu0 0.0
        %263 = vmatpush1.msra.mxu0 0.0
        %264 = vmatprep.subr.mxu0 0.0
        %265 = vmatpush1.msra.mxu0 0.0
        %266 = vmatprep.subr.mxu0 0.0
        %267 = vmatpush1.msra.mxu0 0.0
        %268 = vmatprep.subr.mxu0 0.0
        %269 = vmatpush1.msra.mxu0 0.0
        %270 = vmatprep.subr.mxu0 0.0
        %271 = vmatpush1.msra.mxu0 0.0
        %272 = vmatprep.subr.mxu0 0.0
        %273 = vmatpush1.msra.mxu0 0.0
        %274 = vmatprep.subr.mxu0 0.0
        %275 = vmatpush1.msra.mxu0 0.0
        %276 = vmatprep.subr.mxu0 0.0
        %277 = vmatpush1.msra.mxu0 0.0
        %278 = vmatprep.subr.mxu0 0.0
        %279 = vmatpush1.msra.mxu0 0.0
        %280 = vmatprep.subr.mxu0 0.0
        %281 = vmatpush1.msra.mxu0 0.0
        %282 = vmatprep.subr.mxu0 0.0
        %283 = vmatpush1.msra.mxu0 0.0
        %284 = vmatprep.subr.mxu0 0.0
        %285 = vmatpush1.msra.mxu0 0.0
        %286 = vmatprep.subr.mxu0 0.0
        %287 = vmatpush1.msra.mxu0 0.0
        %288 = vmatprep.subr.mxu0 0.0
        %289 = vmatpush1.msra.mxu0 0.0
        %290 = vmatprep.subr.mxu0 0.0
        %291 = vmatpush1.msra.mxu0 0.0
        %292 = vmatprep.subr.mxu0 0.0
        %293 = vmatpush1.msra.mxu0 0.0
        %294 = vmatprep.subr.mxu0 0.0
        %295 = vmatpush1.msra.mxu0 0.0
        %296 = vmatprep.subr.mxu0 0.0
        %297 = vmatpush1.msra.mxu0 0.0
        %298 = vmatprep.subr.mxu0 0.0
        %299 = vmatpush1.msra.mxu0 0.0
        %300 = vmatprep.mubr.f32.mxu0 0.0
        %301 = vmatmul.mubr.f32.gmra.mrb[0].mxu0 %v234
        %v302 = vpop.f32.mrb[0].mxu0
        %v303 = vadd.f32 %v230, %v302
        %v304 = vpop.f32.mrb[0].mxu0
        %305 = vdwg.mxu0
        %v306 = vmax.f32 %v303, 0.0
        %v307 = vld [vmem:[%s3] sm:$0xff]
        %v308 = vld [vmem:[%s3 + $0x8] sm:$0xff]
        %v309 = vld [vmem:[%s3 + $0x10] sm:$0xff]
        %v310 = vld [vmem:[%s3 + $0x18] sm:$0xff]
        %v311 = vld [vmem:[%s3 + $0x20] sm:$0xff]
        %v312 = vld [vmem:[%s3 + $0x28] sm:$0xff]
        %v313 = vld [vmem:[%s3 + $0x30] sm:$0xff]
        %v314 = vld [vmem:[%s3 + $0x38] sm:$0xff]
        %v315 = vld [vmem:[%s4] sm:$0x1]
        %v317 = vlaneseq
        %v318 = vshrl.u32 %v317, 7
        %v319 = vsub.s32 0, %v318
        %v320 = vrot.slane %v315, %v319
        %vm322 = vcmask 523264
        %v324 = vsel %vm322, %v306, 0
        %326 = vmatprep.subr.mxu0 0.0
        %327 = vmatpush1.msra.mxu0 %v307
        %328 = vmatprep.subr.mxu0 0.0
        %329 = vmatpush1.msra.mxu0 %v308
        %330 = vmatprep.subr.mxu0 0.0
        %331 = vmatpush1.msra.mxu0 %v309
        %332 = vmatprep.subr.mxu0 0.0
        %333 = vmatpush1.msra.mxu0 %v310
        %334 = vmatprep.subr.mxu0 0.0
        %335 = vmatpush1.msra.mxu0 %v311
        %336 = vmatprep.subr.mxu0 0.0
        %337 = vmatpush1.msra.mxu0 %v312
        %338 = vmatprep.subr.mxu0 0.0
        %339 = vmatpush1.msra.mxu0 %v313
        %340 = vmatprep.subr.mxu0 0.0
        %341 = vmatpush1.msra.mxu0 %v314
        %342 = vmatprep.subr.mxu0 0.0
        %343 = vmatpush1.msra.mxu0 0.0
        %344 = vmatprep.subr.mxu0 0.0
        %345 = vmatpush1.msra.mxu0 0.0
        %346 = vmatprep.subr.mxu0 0.0
        %347 = vmatpush1.msra.mxu0 0.0
        %348 = vmatprep.subr.mxu0 0.0
        %349 = vmatpush1.msra.mxu0 0.0
        %350 = vmatprep.subr.mxu0 0.0
        %351 = vmatpush1.msra.mxu0 0.0
        %352 = vmatprep.subr.mxu0 0.0
        %353 = vmatpush1.msra.mxu0 0.0
        %354 = vmatprep.subr.mxu0 0.0
        %355 = vmatpush1.msra.mxu0 0.0
        %356 = vmatprep.subr.mxu0 0.0
        %357 = vmatpush1.msra.mxu0 0.0
        %358 = vmatprep.subr.mxu0 0.0
        %359 = vmatpush1.msra.mxu0 0.0
        %360 = vmatprep.subr.mxu0 0.0
        %361 = vmatpush1.msra.mxu0 0.0
        %362 = vmatprep.subr.mxu0 0.0
        %363 = vmatpush1.msra.mxu0 0.0
        %364 = vmatprep.subr.mxu0 0.0
        %365 = vmatpush1.msra.mxu0 0.0
        %366 = vmatprep.subr.mxu0 0.0
        %367 = vmatpush1.msra.mxu0 0.0
        %368 = vmatprep.subr.mxu0 0.0
        %369 = vmatpush1.msra.mxu0 0.0
        %370 = vmatprep.subr.mxu0 0.0
        %371 = vmatpush1.msra.mxu0 0.0
        %372 = vmatprep.subr.mxu0 0.0
        %373 = vmatpush1.msra.mxu0 0.0
        %374 = vmatprep.subr.mxu0 0.0
        %375 = vmatpush1.msra.mxu0 0.0
        %376 = vmatprep.subr.mxu0 0.0
        %377 = vmatpush1.msra.mxu0 0.0
        %378 = vmatprep.subr.mxu0 0.0
        %379 = vmatpush1.msra.mxu0 0.0
        %380 = vmatprep.subr.mxu0 0.0
        %381 = vmatpush1.msra.mxu0 0.0
        %382 = vmatprep.subr.mxu0 0.0
        %383 = vmatpush1.msra.mxu0 0.0
        %384 = vmatprep.subr.mxu0 0.0
        %385 = vmatpush1.msra.mxu0 0.0
        %386 = vmatprep.subr.mxu0 0.0
        %387 = vmatpush1.msra.mxu0 0.0
        %388 = vmatprep.subr.mxu0 0.0
        %389 = vmatpush1.msra.mxu0 0.0
        %390 = vmatprep.mubr.f32.mxu0 0.0
        %391 = vmatmul.mubr.f32.gmra.mrb[0].mxu0 %v324
        %v392 = vpop.f32.mrb[0].mxu0
        %v393 = vadd.f32 %v320, %v392
        %v394 = vpop.f32.mrb[0].mxu0
        %395 = vdwg.mxu0
        %v396 = vmul.f32 %v393, %v393
        %v397 = vsel %vm232, %v396, 0.0
        %398 = vadd.xlane.f32.xlu0 %v397
        %v399 = vpop.xlane.xlu0 %398
        %v400 = vmax.f32 %v399, 1e-24
        %v401 = vrsqrt.pop %v400
        %v402 = vmul.f32 %v393, %v401
        %403 = vst.msk [vmem:[%s215] sm:$0xff] %vm232, %v402
        %s404 = sand.u32 %s137, 1
        %s405 = scalar_lea.sflag [#allocation3], %s404
        %s406 = sand.u32 %s137, 1
        %s407 = smul.addr %s406, 8
        %s408 = scalar_lea.vmem [#allocation2], %s407
        // Predicated region
        $region41: #{metric_head_forward.1} parent=39 // pred_check
          %p409 = pneg %p147
        $region42: #{metric_head_forward.1} parent=39 // pred_check_branch
          %411 = sbr.rel (%p409) target = $region44
        $region43: #{metric_head_forward.1} parent=39 // pred_region
          %s413 = ssub.s32 128, 128
          %414 = vsyncadd %s405, %s413
          %s415 = smul.addr %s19, 128
          %s416 = scalar_lea.hbm %s5, %s415
          %s418 = sshll.u32 %s408, 4
          %s419 = int_to_ptr.vmem [resolvable:$true] %s418
          %421 = dma.vmem_to_hbm [thread:$0]  %s419, 128, %s416, %s405
        $region44: #{metric_head_forward.1} parent=39 // pred_fallthru
          _
      $region40: #{metric_head_forward.1} parent=5 // pred_fallthru
        _
      %p422 = scmp.le.s32.totalorder 2, %s14
      // Predicated region
      $region45: #{metric_head_forward.1} parent=5 // pred_check
        %p423 = pneg %p422
      $region46: #{metric_head_forward.1} parent=5 // pred_check_branch
        %425 = sbr.rel (%p423) target = $region48
      $region47: #{metric_head_forward.1} parent=5 // pred_region
        %s426 = ssub.s32 %s14, 2
        // Predicated region
        $region49: #{metric_head_forward.1} parent=47 // pred_check
          %p427 = pneg %p153
        $region50: #{metric_head_forward.1} parent=47 // pred_check_branch
          %429 = sbr.rel (%p427) target = $region52
        $region51: #{metric_head_forward.1} parent=47 // pred_region
          %s430 = sand.u32 %s138, 1
          %s431 = scalar_lea.sflag [#allocation3], %s430
          %s432 = sand.u32 %s138, 1
          %s433 = smul.addr %s432, 8
          %s434 = scalar_lea.vmem [#allocation2], %s433
          %435 = dma.done %s431, 128
        $region52: #{metric_head_forward.1} parent=47 // pred_fallthru
          _
      $region48: #{metric_head_forward.1} parent=5 // pred_fallthru
        _
    $region6: #{metric_head_forward.1} parent=1 // loop_footer
      %s18 = sadd.s32 1, %s14
    $region7: #{metric_head_forward.1} parent=1 // loop_footer_branch
      %13 = sbr.rel target = $region3
    $region8: #{metric_head_forward.1} parent=1 // loop_exit
      _
    %436 = vsyncpa [#allocation3], 1
    %s437 = scalar_lea.sflag [#allocation3], 1
    %438 = vsyncpa %s437, 1

</llo_original>
